<compile_context>
chip_gen: v7x
topology: tpu7x:2x2x1
jax: 0.10.0
libtpu: 0.0.40
codegen_flags: <defaults>
</compile_context>

<pallas_src>
import functools

import jax
import jax.numpy as jnp
from jax import lax
from jax.experimental import pallas as pl
from jax.experimental.pallas import tpu as pltpu


def _roll(x, shift, axis):
    """jnp.roll-style cyclic shift via the XLU; no-op when shift % size == 0."""
    n = x.shape[axis]
    s = shift % n
    if s == 0:
        return x
    return pltpu.roll(x, s, axis)


def _conv_mixer_kernel(x_ref, w_ref, b_ref, o_ref, *, H, W, C, Cg, KH, KW, BT):
    # x_ref: (BT, H, W*C)   lane-dense image tile (channels fastest within a row)
    # w_ref: (KH*KW*(2*Cg-1), W*C) per-(tap, channel-offset) lane weight vectors
    #                              (horizontal edge masks already folded in)
    # b_ref: (1, W*C)       bias repeated across W
    # o_ref: (BT, H, W*C)
    ph, pw = KH // 2, KW // 2
    D = 2 * Cg - 1
    WC = W * C

    # Vertical-validity masks, one per vertical offset, shared across kw/delta/BT.
    h_pos = lax.broadcasted_iota(jnp.int32, (H, 1), 0)
    vmask = {}
    for kh in range(KH):
        oh = kh - ph
        if oh != 0:
            vmask[oh] = jnp.logical_and(h_pos + oh >= 0, h_pos + oh < H).astype(
                jnp.float32
            )

    bias = b_ref[0].astype(jnp.float32)  # (WC,)

    for i in range(BT):
        x = x_ref[i].astype(jnp.float32)  # (H, WC), f32 accumulation path
        acc = jnp.zeros((H, WC), jnp.float32)
        for kh in range(KH):
            oh = kh - ph
            xv = _roll(x, -oh, 0)  # row h now holds input row h+oh
            if oh != 0:
                xv = xv * vmask[oh]
            for kw in range(KW):
                for d_idx in range(D):
                    delta = d_idx - (Cg - 1)
                    # combined horizontal (+/- (kw-pw) pixels) and within-group
                    # channel (+delta) shift, both along the lane axis.
                    lane_shift = (kw - pw) * C + delta
                    xs = _roll(xv, -lane_shift, 1)
                    wv = w_ref[(kh * KW + kw) * D + d_idx]  # (WC,) f32
                    acc = acc + xs * wv
        o_ref[i] = (acc + bias).astype(o_ref.dtype)


def _prepare_lane_weights(weight, bias, *, W, C, Cg):
    """Grouped conv weight [C, Cg, KH, KW] -> per-(tap, delta) lane vectors.

    wlane[(kh*KW + kw)*D + d, w*C + co] =
        weight[co, co%Cg + delta, kh, kw]   if 0 <= co%Cg + delta < Cg
                                            and 0 <= w + (kw - pw) < W
        0                                   otherwise
    with delta = d - (Cg - 1).  Horizontal edge masks are folded in here so the
    kernel never does a per-tap select.
    """
    O, Cg_, KH, KW = weight.shape
    assert O == C and Cg_ == Cg
    pw = KW // 2
    D = 2 * Cg - 1

    co = jnp.arange(C)
    co_l = co % Cg
    deltas = jnp.arange(D) - (Cg - 1)                  # (-(Cg-1) .. Cg-1)
    ci_l = co_l[None, :] + deltas[:, None]             # (D, C)
    ch_valid = (ci_l >= 0) & (ci_l < Cg)
    ci_l_c = jnp.clip(ci_l, 0, Cg - 1)

    w_f = weight.astype(jnp.float32)
    w_g = w_f[co[None, :], ci_l_c]                     # (D, C, KH, KW)
    w_g = jnp.where(ch_valid[:, :, None, None], w_g, 0.0)

    w_pos = jnp.arange(W)
    ow = jnp.arange(KW) - pw
    h_valid = ((w_pos[None, :] + ow[:, None]) >= 0) & (
        (w_pos[None, :] + ow[:, None]) < W
    )                                                  # (KW, W)

    wl = jnp.transpose(w_g, (2, 3, 0, 1))              # (KH, KW, D, C)
    wl = wl[:, :, :, None, :] * h_valid[None, :, None, :, None].astype(jnp.float32)
    wlane = wl.reshape(KH * KW * D, W * C)             # (KH*KW*D, W*C)

    blane = jnp.broadcast_to(
        bias.astype(jnp.float32)[None, :], (W, C)
    ).reshape(1, W * C)
    return wlane, blane


def _pick_batch_tile(B, bytes_per_batch_elem):
    # Keep >= 2 grid steps (v7x has 2 TensorCores; also enables pipelining) and
    # cap the per-step input tile at ~2 MiB.
    best = 1
    for bt in range(1, B + 1):
        if B % bt != 0:
            continue
        if B > 1 and B // bt < 2:
            continue
        if bt * bytes_per_batch_elem > 2 * 1024 * 1024:
            continue
        best = bt
    return best


def conv_mixer_forward(x, weight, bias, *, HW, num_heads, batch_tile=None):
    """x: [B, N, C]; weight: [C, C//num_heads, KH, KW]; bias: [C]."""
    B, N, C = x.shape
    H, W = HW
    assert N == H * W
    O, Cg, KH, KW = weight.shape
    assert O == C and Cg * num_heads == C
    assert KH % 2 == 1 and KW % 2 == 1, "padding=k//2 matches 'same' only for odd kernels"
    assert KW // 2 < W and KH // 2 < H

    D = 2 * Cg - 1
    wlane, blane = _prepare_lane_weights(weight, bias, W=W, C=C, Cg=Cg)
    x_im = x.reshape(B, H, W * C)  # free view: identical memory layout, lane-dense

    BT = batch_tile or _pick_batch_tile(B, H * W * C * x.dtype.itemsize)
    assert B % BT == 0

    # VMEM budget: double-buffered in/out tiles + resident weight vectors,
    # with headroom; capped for v7x's 64 MiB physical VMEM.
    tile_bytes = BT * H * W * C * x.dtype.itemsize
    w_bytes = (KH * KW * D + 1) * W * C * 4
    vmem_limit = int(min(64 * 1024 * 1024, max(8 * 1024 * 1024, 6 * tile_bytes + 2 * w_bytes)))

    kernel = functools.partial(
        _conv_mixer_kernel, H=H, W=W, C=C, Cg=Cg, KH=KH, KW=KW, BT=BT
    )
    out = pl.pallas_call(
        kernel,
        out_shape=jax.ShapeDtypeStruct((B, H, W * C), x.dtype),
        grid_spec=pltpu.PrefetchScalarGridSpec(
            num_scalar_prefetch=0,
            grid=(B // BT,),
            in_specs=[
                pl.BlockSpec((BT, H, W * C), lambda b: (b, 0, 0)),
                pl.BlockSpec((KH * KW * D, W * C), lambda b: (0, 0)),
                pl.BlockSpec((1, W * C), lambda b: (0, 0)),
            ],
            out_specs=pl.BlockSpec((BT, H, W * C), lambda b: (b, 0, 0)),
        ),
        compiler_params=pltpu.CompilerParams(
            dimension_semantics=("parallel",),
            vmem_limit_bytes=vmem_limit,
        ),
    )(x_im, wlane, blane)
    return out.reshape(B, N, C)


if __name__ == "__main__":
    # Small shapes consistent with the module: dim=16, num_heads=8, HW=[8,16].
    B, dim, num_heads = 2, 16, 8
    HW = [8, 16]
    local_k = [3, 3]
    H, W = HW
    N = H * W
    Cg = dim // num_heads

    key = jax.random.PRNGKey(0)
    k1, k2, k3 = jax.random.split(key, 3)
    x = jax.random.normal(k1, (B, N, dim), jnp.float32)
    weight = jax.random.normal(k2, (dim, Cg, local_k[0], local_k[1]), jnp.float32) * 0.1
    bias = jax.random.normal(k3, (dim,), jnp.float32) * 0.1

    out = conv_mixer_forward(x, weight, bias, HW=HW, num_heads=num_heads)
    out = jax.block_until_ready(out)

    # Reference: grouped conv in NCHW, exactly as the PyTorch module does it.
    x_nchw = jnp.transpose(x, (0, 2, 1)).reshape(B, dim, H, W)
    ref = lax.conv_general_dilated(
        x_nchw,
        weight,
        window_strides=(1, 1),
        padding=((local_k[0] // 2,) * 2, (local_k[1] // 2,) * 2),
        feature_group_count=num_heads,
        dimension_numbers=("NCHW", "OIHW", "NCHW"),
    ) + bias[None, :, None, None]
    ref = jnp.transpose(ref.reshape(B, dim, N), (0, 2, 1))

    err = float(jnp.max(jnp.abs(out - ref)))
    assert jnp.allclose(out, ref, atol=1e-4, rtol=1e-4), err
    print("KERNEL_OK")
</pallas_src>

<mosaic_0001>
module attributes {stable_mosaic.version = 11 : i64} {
  func.func @_conv_mixer_kernel(%arg0: i32, %arg1: memref<1x8x256xf32, #tpu.memory_space<vmem>>, %arg2: memref<27x256xf32, #tpu.memory_space<vmem>>, %arg3: memref<1x256xf32, #tpu.memory_space<vmem>>, %arg4: memref<1x8x256xf32, #tpu.memory_space<vmem>>) attributes {dimension_semantics = [#tpu.dimension_semantics<parallel>], iteration_bounds = array<i64: 2>, scalar_prefetch = 0 : i64, scratch_operands = 0 : i64, tpu.core_type = #tpu.core_type<tc>, window_params = [{transform_indices = @transform_0, window_bounds = array<i64: 1, 8, 256>}, {pipeline_mode = #tpu.pipeline_mode<synchronous>, transform_indices = @transform_1, window_bounds = array<i64: 27, 256>}, {pipeline_mode = #tpu.pipeline_mode<synchronous>, transform_indices = @transform_2, window_bounds = array<i64: 1, 256>}, {transform_indices = @transform_3, window_bounds = array<i64: 1, 8, 256>}]} {
    %0 = tpu.iota {dimensions = array<i32: 0>} : vector<8x1xi32>
    %c-1_i32 = arith.constant -1 : i32
    %1 = vector.broadcast %c-1_i32 : i32 to vector<8x1xi32>
    %2 = arith.addi %0, %1 : vector<8x1xi32>
    %c0_i32 = arith.constant 0 : i32
    %3 = vector.broadcast %c0_i32 : i32 to vector<8x1xi32>
    %4 = arith.cmpi sge, %2, %3 : vector<8x1xi32>
    %c-1_i32_0 = arith.constant -1 : i32
    %5 = vector.broadcast %c-1_i32_0 : i32 to vector<8x1xi32>
    %6 = arith.addi %0, %5 : vector<8x1xi32>
    %c8_i32 = arith.constant 8 : i32
    %7 = vector.broadcast %c8_i32 : i32 to vector<8x1xi32>
    %8 = arith.cmpi slt, %6, %7 : vector<8x1xi32>
    %9 = arith.andi %4, %8 : vector<8x1xi1>
    %10 = arith.extui %9 : vector<8x1xi1> to vector<8x1xi32>
    %11 = arith.sitofp %10 : vector<8x1xi32> to vector<8x1xf32>
    %c1_i32 = arith.constant 1 : i32
    %12 = vector.broadcast %c1_i32 : i32 to vector<8x1xi32>
    %13 = arith.addi %0, %12 : vector<8x1xi32>
    %c0_i32_1 = arith.constant 0 : i32
    %14 = vector.broadcast %c0_i32_1 : i32 to vector<8x1xi32>
    %15 = arith.cmpi sge, %13, %14 : vector<8x1xi32>
    %c1_i32_2 = arith.constant 1 : i32
    %16 = vector.broadcast %c1_i32_2 : i32 to vector<8x1xi32>
    %17 = arith.addi %0, %16 : vector<8x1xi32>
    %c8_i32_3 = arith.constant 8 : i32
    %18 = vector.broadcast %c8_i32_3 : i32 to vector<8x1xi32>
    %19 = arith.cmpi slt, %17, %18 : vector<8x1xi32>
    %20 = arith.andi %15, %19 : vector<8x1xi1>
    %21 = arith.extui %20 : vector<8x1xi1> to vector<8x1xi32>
    %22 = arith.sitofp %21 : vector<8x1xi32> to vector<8x1xf32>
    %c0 = arith.constant 0 : index
    %c0_4 = arith.constant 0 : index
    %23 = vector.load %arg3[%c0, %c0_4] : memref<1x256xf32, #tpu.memory_space<vmem>>, vector<1x256xf32>
    %24 = vector.shape_cast %23 : vector<1x256xf32> to vector<256xf32>
    %c0_5 = arith.constant 0 : index
    %c0_6 = arith.constant 0 : index
    %c0_7 = arith.constant 0 : index
    %25 = vector.load %arg1[%c0_5, %c0_6, %c0_7] : memref<1x8x256xf32, #tpu.memory_space<vmem>>, vector<1x8x256xf32>
    %26 = vector.shape_cast %25 : vector<1x8x256xf32> to vector<8x256xf32>
    %cst = arith.constant 0.000000e+00 : f32
    %27 = vector.broadcast %cst : f32 to vector<8x256xf32>
    %c1_i32_8 = arith.constant 1 : i32
    %28 = tpu.dynamic_rotate %26 by %c1_i32_8 dim 0 : vector<8x256xf32>, i32 -> vector<8x256xf32>
    %29 = vector.broadcast %11 : vector<8x1xf32> to vector<8x256xf32>
    %30 = arith.mulf %28, %29 : vector<8x256xf32>
    %c17_i32 = arith.constant 17 : i32
    %31 = tpu.dynamic_rotate %30 by %c17_i32 dim 1 : vector<8x256xf32>, i32 -> vector<8x256xf32>
    %c0_9 = arith.constant 0 : index
    %c0_10 = arith.constant 0 : index
    %32 = vector.load %arg2[%c0_9, %c0_10] : memref<27x256xf32, #tpu.memory_space<vmem>>, vector<1x256xf32>
    %33 = vector.shape_cast %32 : vector<1x256xf32> to vector<256xf32>
    %34 = vector.shape_cast %33 : vector<256xf32> to vector<1x256xf32>
    %35 = vector.broadcast %34 : vector<1x256xf32> to vector<8x256xf32>
    %36 = arith.mulf %31, %35 : vector<8x256xf32>
    %37 = arith.addf %27, %36 : vector<8x256xf32>
    %c16_i32 = arith.constant 16 : i32
    %38 = tpu.dynamic_rotate %30 by %c16_i32 dim 1 : vector<8x256xf32>, i32 -> vector<8x256xf32>
    %c1 = arith.constant 1 : index
    %c0_11 = arith.constant 0 : index
    %39 = vector.load %arg2[%c1, %c0_11] : memref<27x256xf32, #tpu.memory_space<vmem>>, vector<1x256xf32>
    %40 = vector.shape_cast %39 : vector<1x256xf32> to vector<256xf32>
    %41 = vector.shape_cast %40 : vector<256xf32> to vector<1x256xf32>
    %42 = vector.broadcast %41 : vector<1x256xf32> to vector<8x256xf32>
    %43 = arith.mulf %38, %42 : vector<8x256xf32>
    %44 = arith.addf %37, %43 : vector<8x256xf32>
    %c15_i32 = arith.constant 15 : i32
    %45 = tpu.dynamic_rotate %30 by %c15_i32 dim 1 : vector<8x256xf32>, i32 -> vector<8x256xf32>
    %c2 = arith.constant 2 : index
    %c0_12 = arith.constant 0 : index
    %46 = vector.load %arg2[%c2, %c0_12] : memref<27x256xf32, #tpu.memory_space<vmem>>, vector<1x256xf32>
    %47 = vector.shape_cast %46 : vector<1x256xf32> to vector<256xf32>
    %48 = vector.shape_cast %47 : vector<256xf32> to vector<1x256xf32>
    %49 = vector.broadcast %48 : vector<1x256xf32> to vector<8x256xf32>
    %50 = arith.mulf %45, %49 : vector<8x256xf32>
    %51 = arith.addf %44, %50 : vector<8x256xf32>
    %c1_i32_13 = arith.constant 1 : i32
    %52 = tpu.dynamic_rotate %30 by %c1_i32_13 dim 1 : vector<8x256xf32>, i32 -> vector<8x256xf32>
    %c3 = arith.constant 3 : index
    %c0_14 = arith.constant 0 : index
    %53 = vector.load %arg2[%c3, %c0_14] : memref<27x256xf32, #tpu.memory_space<vmem>>, vector<1x256xf32>
    %54 = vector.shape_cast %53 : vector<1x256xf32> to vector<256xf32>
    %55 = vector.shape_cast %54 : vector<256xf32> to vector<1x256xf32>
    %56 = vector.broadcast %55 : vector<1x256xf32> to vector<8x256xf32>
    %57 = arith.mulf %52, %56 : vector<8x256xf32>
    %58 = arith.addf %51, %57 : vector<8x256xf32>
    %c4 = arith.constant 4 : index
    %c0_15 = arith.constant 0 : index
    %59 = vector.load %arg2[%c4, %c0_15] : memref<27x256xf32, #tpu.memory_space<vmem>>, vector<1x256xf32>
    %60 = vector.shape_cast %59 : vector<1x256xf32> to vector<256xf32>
    %61 = vector.shape_cast %60 : vector<256xf32> to vector<1x256xf32>
    %62 = vector.broadcast %61 : vector<1x256xf32> to vector<8x256xf32>
    %63 = arith.mulf %30, %62 : vector<8x256xf32>
    %64 = arith.addf %58, %63 : vector<8x256xf32>
    %c255_i32 = arith.constant 255 : i32
    %65 = tpu.dynamic_rotate %30 by %c255_i32 dim 1 : vector<8x256xf32>, i32 -> vector<8x256xf32>
    %c5 = arith.constant 5 : index
    %c0_16 = arith.constant 0 : index
    %66 = vector.load %arg2[%c5, %c0_16] : memref<27x256xf32, #tpu.memory_space<vmem>>, vector<1x256xf32>
    %67 = vector.shape_cast %66 : vector<1x256xf32> to vector<256xf32>
    %68 = vector.shape_cast %67 : vector<256xf32> to vector<1x256xf32>
    %69 = vector.broadcast %68 : vector<1x256xf32> to vector<8x256xf32>
    %70 = arith.mulf %65, %69 : vector<8x256xf32>
    %71 = arith.addf %64, %70 : vector<8x256xf32>
    %c241_i32 = arith.constant 241 : i32
    %72 = tpu.dynamic_rotate %30 by %c241_i32 dim 1 : vector<8x256xf32>, i32 -> vector<8x256xf32>
    %c6 = arith.constant 6 : index
    %c0_17 = arith.constant 0 : index
    %73 = vector.load %arg2[%c6, %c0_17] : memref<27x256xf32, #tpu.memory_space<vmem>>, vector<1x256xf32>
    %74 = vector.shape_cast %73 : vector<1x256xf32> to vector<256xf32>
    %75 = vector.shape_cast %74 : vector<256xf32> to vector<1x256xf32>
    %76 = vector.broadcast %75 : vector<1x256xf32> to vector<8x256xf32>
    %77 = arith.mulf %72, %76 : vector<8x256xf32>
    %78 = arith.addf %71, %77 : vector<8x256xf32>
    %c240_i32 = arith.constant 240 : i32
    %79 = tpu.dynamic_rotate %30 by %c240_i32 dim 1 : vector<8x256xf32>, i32 -> vector<8x256xf32>
    %c7 = arith.constant 7 : index
    %c0_18 = arith.constant 0 : index
    %80 = vector.load %arg2[%c7, %c0_18] : memref<27x256xf32, #tpu.memory_space<vmem>>, vector<1x256xf32>
    %81 = vector.shape_cast %80 : vector<1x256xf32> to vector<256xf32>
    %82 = vector.shape_cast %81 : vector<256xf32> to vector<1x256xf32>
    %83 = vector.broadcast %82 : vector<1x256xf32> to vector<8x256xf32>
    %84 = arith.mulf %79, %83 : vector<8x256xf32>
    %85 = arith.addf %78, %84 : vector<8x256xf32>
    %c239_i32 = arith.constant 239 : i32
    %86 = tpu.dynamic_rotate %30 by %c239_i32 dim 1 : vector<8x256xf32>, i32 -> vector<8x256xf32>
    %c8 = arith.constant 8 : index
    %c0_19 = arith.constant 0 : index
    %87 = vector.load %arg2[%c8, %c0_19] : memref<27x256xf32, #tpu.memory_space<vmem>>, vector<1x256xf32>
    %88 = vector.shape_cast %87 : vector<1x256xf32> to vector<256xf32>
    %89 = vector.shape_cast %88 : vector<256xf32> to vector<1x256xf32>
    %90 = vector.broadcast %89 : vector<1x256xf32> to vector<8x256xf32>
    %91 = arith.mulf %86, %90 : vector<8x256xf32>
    %92 = arith.addf %85, %91 : vector<8x256xf32>
    %c17_i32_20 = arith.constant 17 : i32
    %93 = tpu.dynamic_rotate %26 by %c17_i32_20 dim 1 : vector<8x256xf32>, i32 -> vector<8x256xf32>
    %c9 = arith.constant 9 : index
    %c0_21 = arith.constant 0 : index
    %94 = vector.load %arg2[%c9, %c0_21] : memref<27x256xf32, #tpu.memory_space<vmem>>, vector<1x256xf32>
    %95 = vector.shape_cast %94 : vector<1x256xf32> to vector<256xf32>
    %96 = vector.shape_cast %95 : vector<256xf32> to vector<1x256xf32>
    %97 = vector.broadcast %96 : vector<1x256xf32> to vector<8x256xf32>
    %98 = arith.mulf %93, %97 : vector<8x256xf32>
    %99 = arith.addf %92, %98 : vector<8x256xf32>
    %c16_i32_22 = arith.constant 16 : i32
    %100 = tpu.dynamic_rotate %26 by %c16_i32_22 dim 1 : vector<8x256xf32>, i32 -> vector<8x256xf32>
    %c10 = arith.constant 10 : index
    %c0_23 = arith.constant 0 : index
    %101 = vector.load %arg2[%c10, %c0_23] : memref<27x256xf32, #tpu.memory_space<vmem>>, vector<1x256xf32>
    %102 = vector.shape_cast %101 : vector<1x256xf32> to vector<256xf32>
    %103 = vector.shape_cast %102 : vector<256xf32> to vector<1x256xf32>
    %104 = vector.broadcast %103 : vector<1x256xf32> to vector<8x256xf32>
    %105 = arith.mulf %100, %104 : vector<8x256xf32>
    %106 = arith.addf %99, %105 : vector<8x256xf32>
    %c15_i32_24 = arith.constant 15 : i32
    %107 = tpu.dynamic_rotate %26 by %c15_i32_24 dim 1 : vector<8x256xf32>, i32 -> vector<8x256xf32>
    %c11 = arith.constant 11 : index
    %c0_25 = arith.constant 0 : index
    %108 = vector.load %arg2[%c11, %c0_25] : memref<27x256xf32, #tpu.memory_space<vmem>>, vector<1x256xf32>
    %109 = vector.shape_cast %108 : vector<1x256xf32> to vector<256xf32>
    %110 = vector.shape_cast %109 : vector<256xf32> to vector<1x256xf32>
    %111 = vector.broadcast %110 : vector<1x256xf32> to vector<8x256xf32>
    %112 = arith.mulf %107, %111 : vector<8x256xf32>
    %113 = arith.addf %106, %112 : vector<8x256xf32>
    %c1_i32_26 = arith.constant 1 : i32
    %114 = tpu.dynamic_rotate %26 by %c1_i32_26 dim 1 : vector<8x256xf32>, i32 -> vector<8x256xf32>
    %c12 = arith.constant 12 : index
    %c0_27 = arith.constant 0 : index
    %115 = vector.load %arg2[%c12, %c0_27] : memref<27x256xf32, #tpu.memory_space<vmem>>, vector<1x256xf32>
    %116 = vector.shape_cast %115 : vector<1x256xf32> to vector<256xf32>
    %117 = vector.shape_cast %116 : vector<256xf32> to vector<1x256xf32>
    %118 = vector.broadcast %117 : vector<1x256xf32> to vector<8x256xf32>
    %119 = arith.mulf %114, %118 : vector<8x256xf32>
    %120 = arith.addf %113, %119 : vector<8x256xf32>
    %c13 = arith.constant 13 : index
    %c0_28 = arith.constant 0 : index
    %121 = vector.load %arg2[%c13, %c0_28] : memref<27x256xf32, #tpu.memory_space<vmem>>, vector<1x256xf32>
    %122 = vector.shape_cast %121 : vector<1x256xf32> to vector<256xf32>
    %123 = vector.shape_cast %122 : vector<256xf32> to vector<1x256xf32>
    %124 = vector.broadcast %123 : vector<1x256xf32> to vector<8x256xf32>
    %125 = arith.mulf %26, %124 : vector<8x256xf32>
    %126 = arith.addf %120, %125 : vector<8x256xf32>
    %c255_i32_29 = arith.constant 255 : i32
    %127 = tpu.dynamic_rotate %26 by %c255_i32_29 dim 1 : vector<8x256xf32>, i32 -> vector<8x256xf32>
    %c14 = arith.constant 14 : index
    %c0_30 = arith.constant 0 : index
    %128 = vector.load %arg2[%c14, %c0_30] : memref<27x256xf32, #tpu.memory_space<vmem>>, vector<1x256xf32>
    %129 = vector.shape_cast %128 : vector<1x256xf32> to vector<256xf32>
    %130 = vector.shape_cast %129 : vector<256xf32> to vector<1x256xf32>
    %131 = vector.broadcast %130 : vector<1x256xf32> to vector<8x256xf32>
    %132 = arith.mulf %127, %131 : vector<8x256xf32>
    %133 = arith.addf %126, %132 : vector<8x256xf32>
    %c241_i32_31 = arith.constant 241 : i32
    %134 = tpu.dynamic_rotate %26 by %c241_i32_31 dim 1 : vector<8x256xf32>, i32 -> vector<8x256xf32>
    %c15 = arith.constant 15 : index
    %c0_32 = arith.constant 0 : index
    %135 = vector.load %arg2[%c15, %c0_32] : memref<27x256xf32, #tpu.memory_space<vmem>>, vector<1x256xf32>
    %136 = vector.shape_cast %135 : vector<1x256xf32> to vector<256xf32>
    %137 = vector.shape_cast %136 : vector<256xf32> to vector<1x256xf32>
    %138 = vector.broadcast %137 : vector<1x256xf32> to vector<8x256xf32>
    %139 = arith.mulf %134, %138 : vector<8x256xf32>
    %140 = arith.addf %133, %139 : vector<8x256xf32>
    %c240_i32_33 = arith.constant 240 : i32
    %141 = tpu.dynamic_rotate %26 by %c240_i32_33 dim 1 : vector<8x256xf32>, i32 -> vector<8x256xf32>
    %c16 = arith.constant 16 : index
    %c0_34 = arith.constant 0 : index
    %142 = vector.load %arg2[%c16, %c0_34] : memref<27x256xf32, #tpu.memory_space<vmem>>, vector<1x256xf32>
    %143 = vector.shape_cast %142 : vector<1x256xf32> to vector<256xf32>
    %144 = vector.shape_cast %143 : vector<256xf32> to vector<1x256xf32>
    %145 = vector.broadcast %144 : vector<1x256xf32> to vector<8x256xf32>
    %146 = arith.mulf %141, %145 : vector<8x256xf32>
    %147 = arith.addf %140, %146 : vector<8x256xf32>
    %c239_i32_35 = arith.constant 239 : i32
    %148 = tpu.dynamic_rotate %26 by %c239_i32_35 dim 1 : vector<8x256xf32>, i32 -> vector<8x256xf32>
    %c17 = arith.constant 17 : index
    %c0_36 = arith.constant 0 : index
    %149 = vector.load %arg2[%c17, %c0_36] : memref<27x256xf32, #tpu.memory_space<vmem>>, vector<1x256xf32>
    %150 = vector.shape_cast %149 : vector<1x256xf32> to vector<256xf32>
    %151 = vector.shape_cast %150 : vector<256xf32> to vector<1x256xf32>
    %152 = vector.broadcast %151 : vector<1x256xf32> to vector<8x256xf32>
    %153 = arith.mulf %148, %152 : vector<8x256xf32>
    %154 = arith.addf %147, %153 : vector<8x256xf32>
    %c7_i32 = arith.constant 7 : i32
    %155 = tpu.dynamic_rotate %26 by %c7_i32 dim 0 : vector<8x256xf32>, i32 -> vector<8x256xf32>
    %156 = vector.broadcast %22 : vector<8x1xf32> to vector<8x256xf32>
    %157 = arith.mulf %155, %156 : vector<8x256xf32>
    %c17_i32_37 = arith.constant 17 : i32
    %158 = tpu.dynamic_rotate %157 by %c17_i32_37 dim 1 : vector<8x256xf32>, i32 -> vector<8x256xf32>
    %c18 = arith.constant 18 : index
    %c0_38 = arith.constant 0 : index
    %159 = vector.load %arg2[%c18, %c0_38] : memref<27x256xf32, #tpu.memory_space<vmem>>, vector<1x256xf32>
    %160 = vector.shape_cast %159 : vector<1x256xf32> to vector<256xf32>
    %161 = vector.shape_cast %160 : vector<256xf32> to vector<1x256xf32>
    %162 = vector.broadcast %161 : vector<1x256xf32> to vector<8x256xf32>
    %163 = arith.mulf %158, %162 : vector<8x256xf32>
    %164 = arith.addf %154, %163 : vector<8x256xf32>
    %c16_i32_39 = arith.constant 16 : i32
    %165 = tpu.dynamic_rotate %157 by %c16_i32_39 dim 1 : vector<8x256xf32>, i32 -> vector<8x256xf32>
    %c19 = arith.constant 19 : index
    %c0_40 = arith.constant 0 : index
    %166 = vector.load %arg2[%c19, %c0_40] : memref<27x256xf32, #tpu.memory_space<vmem>>, vector<1x256xf32>
    %167 = vector.shape_cast %166 : vector<1x256xf32> to vector<256xf32>
    %168 = vector.shape_cast %167 : vector<256xf32> to vector<1x256xf32>
    %169 = vector.broadcast %168 : vector<1x256xf32> to vector<8x256xf32>
    %170 = arith.mulf %165, %169 : vector<8x256xf32>
    %171 = arith.addf %164, %170 : vector<8x256xf32>
    %c15_i32_41 = arith.constant 15 : i32
    %172 = tpu.dynamic_rotate %157 by %c15_i32_41 dim 1 : vector<8x256xf32>, i32 -> vector<8x256xf32>
    %c20 = arith.constant 20 : index
    %c0_42 = arith.constant 0 : index
    %173 = vector.load %arg2[%c20, %c0_42] : memref<27x256xf32, #tpu.memory_space<vmem>>, vector<1x256xf32>
    %174 = vector.shape_cast %173 : vector<1x256xf32> to vector<256xf32>
    %175 = vector.shape_cast %174 : vector<256xf32> to vector<1x256xf32>
    %176 = vector.broadcast %175 : vector<1x256xf32> to vector<8x256xf32>
    %177 = arith.mulf %172, %176 : vector<8x256xf32>
    %178 = arith.addf %171, %177 : vector<8x256xf32>
    %c1_i32_43 = arith.constant 1 : i32
    %179 = tpu.dynamic_rotate %157 by %c1_i32_43 dim 1 : vector<8x256xf32>, i32 -> vector<8x256xf32>
    %c21 = arith.constant 21 : index
    %c0_44 = arith.constant 0 : index
    %180 = vector.load %arg2[%c21, %c0_44] : memref<27x256xf32, #tpu.memory_space<vmem>>, vector<1x256xf32>
    %181 = vector.shape_cast %180 : vector<1x256xf32> to vector<256xf32>
    %182 = vector.shape_cast %181 : vector<256xf32> to vector<1x256xf32>
    %183 = vector.broadcast %182 : vector<1x256xf32> to vector<8x256xf32>
    %184 = arith.mulf %179, %183 : vector<8x256xf32>
    %185 = arith.addf %178, %184 : vector<8x256xf32>
    %c22 = arith.constant 22 : index
    %c0_45 = arith.constant 0 : index
    %186 = vector.load %arg2[%c22, %c0_45] : memref<27x256xf32, #tpu.memory_space<vmem>>, vector<1x256xf32>
    %187 = vector.shape_cast %186 : vector<1x256xf32> to vector<256xf32>
    %188 = vector.shape_cast %187 : vector<256xf32> to vector<1x256xf32>
    %189 = vector.broadcast %188 : vector<1x256xf32> to vector<8x256xf32>
    %190 = arith.mulf %157, %189 : vector<8x256xf32>
    %191 = arith.addf %185, %190 : vector<8x256xf32>
    %c255_i32_46 = arith.constant 255 : i32
    %192 = tpu.dynamic_rotate %157 by %c255_i32_46 dim 1 : vector<8x256xf32>, i32 -> vector<8x256xf32>
    %c23 = arith.constant 23 : index
    %c0_47 = arith.constant 0 : index
    %193 = vector.load %arg2[%c23, %c0_47] : memref<27x256xf32, #tpu.memory_space<vmem>>, vector<1x256xf32>
    %194 = vector.shape_cast %193 : vector<1x256xf32> to vector<256xf32>
    %195 = vector.shape_cast %194 : vector<256xf32> to vector<1x256xf32>
    %196 = vector.broadcast %195 : vector<1x256xf32> to vector<8x256xf32>
    %197 = arith.mulf %192, %196 : vector<8x256xf32>
    %198 = arith.addf %191, %197 : vector<8x256xf32>
    %c241_i32_48 = arith.constant 241 : i32
    %199 = tpu.dynamic_rotate %157 by %c241_i32_48 dim 1 : vector<8x256xf32>, i32 -> vector<8x256xf32>
    %c24 = arith.constant 24 : index
    %c0_49 = arith.constant 0 : index
    %200 = vector.load %arg2[%c24, %c0_49] : memref<27x256xf32, #tpu.memory_space<vmem>>, vector<1x256xf32>
    %201 = vector.shape_cast %200 : vector<1x256xf32> to vector<256xf32>
    %202 = vector.shape_cast %201 : vector<256xf32> to vector<1x256xf32>
    %203 = vector.broadcast %202 : vector<1x256xf32> to vector<8x256xf32>
    %204 = arith.mulf %199, %203 : vector<8x256xf32>
    %205 = arith.addf %198, %204 : vector<8x256xf32>
    %c240_i32_50 = arith.constant 240 : i32
    %206 = tpu.dynamic_rotate %157 by %c240_i32_50 dim 1 : vector<8x256xf32>, i32 -> vector<8x256xf32>
    %c25 = arith.constant 25 : index
    %c0_51 = arith.constant 0 : index
    %207 = vector.load %arg2[%c25, %c0_51] : memref<27x256xf32, #tpu.memory_space<vmem>>, vector<1x256xf32>
    %208 = vector.shape_cast %207 : vector<1x256xf32> to vector<256xf32>
    %209 = vector.shape_cast %208 : vector<256xf32> to vector<1x256xf32>
    %210 = vector.broadcast %209 : vector<1x256xf32> to vector<8x256xf32>
    %211 = arith.mulf %206, %210 : vector<8x256xf32>
    %212 = arith.addf %205, %211 : vector<8x256xf32>
    %c239_i32_52 = arith.constant 239 : i32
    %213 = tpu.dynamic_rotate %157 by %c239_i32_52 dim 1 : vector<8x256xf32>, i32 -> vector<8x256xf32>
    %c26 = arith.constant 26 : index
    %c0_53 = arith.constant 0 : index
    %214 = vector.load %arg2[%c26, %c0_53] : memref<27x256xf32, #tpu.memory_space<vmem>>, vector<1x256xf32>
    %215 = vector.shape_cast %214 : vector<1x256xf32> to vector<256xf32>
    %216 = vector.shape_cast %215 : vector<256xf32> to vector<1x256xf32>
    %217 = vector.broadcast %216 : vector<1x256xf32> to vector<8x256xf32>
    %218 = arith.mulf %213, %217 : vector<8x256xf32>
    %219 = arith.addf %212, %218 : vector<8x256xf32>
    %220 = vector.shape_cast %24 : vector<256xf32> to vector<1x256xf32>
    %221 = vector.broadcast %220 : vector<1x256xf32> to vector<8x256xf32>
    %222 = arith.addf %219, %221 : vector<8x256xf32>
    %c0_54 = arith.constant 0 : index
    %c0_55 = arith.constant 0 : index
    %c0_56 = arith.constant 0 : index
    %223 = vector.load %arg4[%c0_54, %c0_55, %c0_56] : memref<1x8x256xf32, #tpu.memory_space<vmem>>, vector<1x8x256xf32>
    %224 = vector.shape_cast %223 : vector<1x8x256xf32> to vector<8x256xf32>
    %225 = vector.shape_cast %222 : vector<8x256xf32> to vector<1x8x256xf32>
    tpu.vector_store %arg4[%c0_54, %c0_55, %c0_56], %225 {strides = array<i32>} : memref<1x8x256xf32, #tpu.memory_space<vmem>>, vector<1x8x256xf32>,
    return
  }
  func.func @transform_0(%arg0: i32) -> (i32, i32, i32) {
    %c0_i32 = arith.constant 0 : i32
    %c0_i32_0 = arith.constant 0 : i32
    %c0_i32_1 = arith.constant 0 : i32
    return %arg0, %c0_i32, %c0_i32_0 : i32, i32, i32
  }
  func.func @transform_1(%arg0: i32) -> (i32, i32) {
    %c0_i32 = arith.constant 0 : i32
    %c0_i32_0 = arith.constant 0 : i32
    %c0_i32_1 = arith.constant 0 : i32
    return %c0_i32, %c0_i32_0 : i32, i32
  }
  func.func @transform_2(%arg0: i32) -> (i32, i32) {
    %c0_i32 = arith.constant 0 : i32
    %c0_i32_0 = arith.constant 0 : i32
    %c0_i32_1 = arith.constant 0 : i32
    return %c0_i32, %c0_i32_0 : i32, i32
  }
  func.func @transform_3(%arg0: i32) -> (i32, i32, i32) {
    %c0_i32 = arith.constant 0 : i32
    %c0_i32_0 = arith.constant 0 : i32
    %c0_i32_1 = arith.constant 0 : i32
    return %arg0, %c0_i32, %c0_i32_0 : i32, i32, i32
  }
}

</mosaic_0001>

<llo_original>
// kernel: tpu_custom_call.1
$region0: #{tpu_custom_call.1}
  #allocation0 [shape = 'u32[]', space=smem, size = 0x4, offset = 0x4, fixed_abs, tag = 'smem constant byte address 0x4 - core index']
  #allocation1 [shape = 'u32[144,128]{1,0:T(1,128)}', space=vmem, size = 0x12000, scoped, tag = 'internal scratch']
  %s0 = inlined_call_operand.hbm [shape: f32[2,8,256], index: 0, kind: input, shape index: {}]
  %s1 = inlined_call_operand.hbm [shape: f32[27,256], index: 1, kind: input, shape index: {}]
  %s2 = inlined_call_operand.vmem [shape: f32[1,256], index: 2, kind: input, shape index: {}]
  %s3 = inlined_call_operand.hbm [shape: f32[2,8,256], index: 3, kind: output, shape index: {}]
  %s4 = sld [smem:[#allocation0]]
  $region53: #{tpu_custom_call.1} parent=0
    _
  %s6 = ssub.s32 1, %s4
  %s7 = scalar_select 0, %s6, %s4
  $region1: #{tpu_custom_call.1} parent=0
    #allocation2 [shape = 'u8[16384]{0}', space=vmem, size = 0x4000, scoped, tag = 'input window, operand 0']
    #allocation3 [shape = 's32[2]{0}', space=sflag, size = 0x8, scoped, tag = 'scoped memory for tpu_custom_call.1']
    #allocation4 [shape = 's32[2]{0}', space=sflag, size = 0x8, scoped, tag = 'scoped memory for tpu_custom_call.1']
    #allocation5 [shape = 'u8[32768]{0}', space=vmem, size = 0x8000, scoped, tag = 'input window, operand 1, single buffered']
    #allocation6 [shape = 's32[1]{0}', space=sflag, size = 0x4, scoped, tag = 'scoped memory for tpu_custom_call.1']
    #allocation7 [shape = 'u8[16384]{0}', space=vmem, size = 0x4000, scoped, tag = 'output window, operand 0']
    %8 = vsyncpa [#allocation3], 0
    %s9 = scalar_lea.sflag [#allocation3], 1
    %10 = vsyncpa %s9, 0
    %11 = vsyncpa [#allocation6], 0
    %12 = vsyncpa [#allocation4], 0
    %s13 = scalar_lea.sflag [#allocation4], 1
    %14 = vsyncpa %s13, 0
    loop: start=0, step=1, limit=4
    $region2: #{tpu_custom_call.1} parent=1 // loop_pre_header
      _
    $region3: #{tpu_custom_call.1} parent=1 // loop_header
      %s16 = sphi 0, %s20
      %p17 = scmp.ge.s32.totalorder %s16, 4
      %s26 = sphi 0, %s28
      %s29 = sphi 0, %s26
      %s30 = sphi 0, %s29
      %s46 = sphi 0, %s30
      %s50 = sphi 0, %s50
      %s52 = sphi 0, %s50
      %s53 = sphi 0, %s52
      %s67 = sphi 0, %s53
      %s71 = sphi 0, %s71
      %s73 = sphi 0, %s71
      %s74 = sphi 0, %s73
      %s88 = sphi 0, %s74
      %s94 = sphi 0, %s96
      %s97 = sphi 0, %s94
      %s98 = sphi 0, %s97
      %s114 = sphi 0, %s98
    $region4: #{tpu_custom_call.1} parent=1 // loop_header_branch
      %19 = sbr.rel (%p17) target = $region8
    $region5: #{tpu_custom_call.1} parent=1 // loop_body
      %s21 = ssub.s32 %s16, 1
      %s22 = ssub.s32 %s16, 2
      %s23 = sadd.s32 %s16, 1
      %s24 = ssub.s32 %s16, %s23
      %p25 = scmp.eq.s32.totalorder %s24, 0
      %s27 = sadd.s32 %s26, 1
      %s28 = scalar_select %p25, %s26, %s27
      %p31 = pneg %p25
      %p32 = scmp.eq.s32.totalorder %s16, 1
      %p33 = por %p31, %p32
      %p34 = scmp.ne.s32.totalorder %s26, %s29
      %p35 = scmp.eq.s32.totalorder %s16, 0
      %p36 = por %p34, %p35
      %p37 = scmp.ne.s32.totalorder %s26, %s29
      %p38 = scmp.eq.s32.totalorder %s21, 1
      %p39 = por %p37, %p38
      %p40 = scmp.ne.s32.totalorder %s29, %s30
      %p41 = scmp.eq.s32.totalorder %s21, 0
      %p42 = por %p40, %p41
      %p43 = scmp.ne.s32.totalorder %s29, %s30
      %p44 = scmp.eq.s32.totalorder %s22, 1
      %p45 = por %p43, %p44
      %p47 = scmp.ne.s32.totalorder %s30, %s46
      %p48 = scmp.eq.s32.totalorder %s22, 0
      %p49 = por %p47, %p48
      %s51 = sadd.s32 %s50, 1
      %p54 = scmp.eq.s32.totalorder %s16, 1
      %p55 = scmp.ne.s32.totalorder %s50, %s52
      %p56 = scmp.eq.s32.totalorder %s16, 0
      %p57 = por %p55, %p56
      %p58 = scmp.ne.s32.totalorder %s50, %s52
      %p59 = scmp.eq.s32.totalorder %s21, 1
      %p60 = por %p58, %p59
      %p61 = scmp.ne.s32.totalorder %s52, %s53
      %p62 = scmp.eq.s32.totalorder %s21, 0
      %p63 = por %p61, %p62
      %p64 = scmp.ne.s32.totalorder %s52, %s53
      %p65 = scmp.eq.s32.totalorder %s22, 1
      %p66 = por %p64, %p65
      %p68 = scmp.ne.s32.totalorder %s53, %s67
      %p69 = scmp.eq.s32.totalorder %s22, 0
      %p70 = por %p68, %p69
      %s72 = sadd.s32 %s71, 1
      %p75 = scmp.eq.s32.totalorder %s16, 1
      %p76 = scmp.ne.s32.totalorder %s71, %s73
      %p77 = scmp.eq.s32.totalorder %s16, 0
      %p78 = por %p76, %p77
      %p79 = scmp.ne.s32.totalorder %s71, %s73
      %p80 = scmp.eq.s32.totalorder %s21, 1
      %p81 = por %p79, %p80
      %p82 = scmp.ne.s32.totalorder %s73, %s74
      %p83 = scmp.eq.s32.totalorder %s21, 0
      %p84 = por %p82, %p83
      %p85 = scmp.ne.s32.totalorder %s73, %s74
      %p86 = scmp.eq.s32.totalorder %s22, 1
      %p87 = por %p85, %p86
      %p89 = scmp.ne.s32.totalorder %s74, %s88
      %p90 = scmp.eq.s32.totalorder %s22, 0
      %p91 = por %p89, %p90
      %s92 = ssub.s32 %s16, %s23
      %p93 = scmp.eq.s32.totalorder %s92, 0
      %s95 = sadd.s32 %s94, 1
      %s96 = scalar_select %p93, %s94, %s95
      %p99 = pneg %p93
      %p100 = scmp.eq.s32.totalorder %s16, 1
      %p101 = por %p99, %p100
      %p102 = scmp.ne.s32.totalorder %s94, %s97
      %p103 = scmp.eq.s32.totalorder %s16, 0
      %p104 = por %p102, %p103
      %p105 = scmp.ne.s32.totalorder %s94, %s97
      %p106 = scmp.eq.s32.totalorder %s21, 1
      %p107 = por %p105, %p106
      %p108 = scmp.ne.s32.totalorder %s97, %s98
      %p109 = scmp.eq.s32.totalorder %s21, 0
      %p110 = por %p108, %p109
      %p111 = scmp.ne.s32.totalorder %s97, %s98
      %p112 = scmp.eq.s32.totalorder %s22, 1
      %p113 = por %p111, %p112
      %p115 = scmp.ne.s32.totalorder %s98, %s114
      %p116 = scmp.eq.s32.totalorder %s22, 0
      %p117 = por %p115, %p116
      %p118 = scmp.le.s32.totalorder 1, %s16
      %p119 = scmp.lt.s32.totalorder %s16, 3
      %p120 = pnand %p118, %p119
      %p121 = pneg %p120
      // Predicated region
      $region9: #{tpu_custom_call.1} parent=5 // pred_check
        _
      $region10: #{tpu_custom_call.1} parent=5 // pred_check_branch
        %123 = sbr.rel (%p120) target = $region12
      $region11: #{tpu_custom_call.1} parent=5 // pred_region
        %s124 = ssub.s32 %s16, 1
        // Predicated region
        $region13: #{tpu_custom_call.1} parent=11 // pred_check
          %p125 = pneg %p63
        $region14: #{tpu_custom_call.1} parent=11 // pred_check_branch
          %127 = sbr.rel (%p125) target = $region16
        $region15: #{tpu_custom_call.1} parent=11 // pred_region
          %s129 = ssub.s32 1024, 1024
          %130 = vsyncadd [#allocation6], %s129
          %s131 = sshll.u32 [#allocation5], 4
          %s132 = int_to_ptr.vmem [resolvable:$true] %s131
          %137 = dma.hbm_to_vmem [thread:$0]  %s1, 1024, %s132, [#allocation6], 256, 256, 16
        $region16: #{tpu_custom_call.1} parent=11 // pred_fallthru
          _
        // Predicated region
        $region17: #{tpu_custom_call.1} parent=11 // pred_check
          %p138 = pneg %p84
        $region18: #{tpu_custom_call.1} parent=11 // pred_check_branch
          %140 = sbr.rel (%p138) target = $region20
        $region19: #{tpu_custom_call.1} parent=11 // pred_region
          _
        $region20: #{tpu_custom_call.1} parent=11 // pred_fallthru
          _
      $region12: #{tpu_custom_call.1} parent=5 // pred_fallthru
        _
      %p141 = scmp.lt.s32.totalorder %s16, 2
      // Predicated region
      $region21: #{tpu_custom_call.1} parent=5 // pred_check
        %p142 = pneg %p141
      $region22: #{tpu_custom_call.1} parent=5 // pred_check_branch
        %144 = sbr.rel (%p142) target = $region24
      $region23: #{tpu_custom_call.1} parent=5 // pred_region
        // Predicated region
        $region25: #{tpu_custom_call.1} parent=23 // pred_check
          %p145 = pneg %p36
        $region26: #{tpu_custom_call.1} parent=23 // pred_check_branch
          %147 = sbr.rel (%p145) target = $region28
        $region27: #{tpu_custom_call.1} parent=23 // pred_region
          %s148 = sand.u32 %s26, 1
          %s149 = scalar_lea.sflag [#allocation3], %s148
          %s150 = sand.u32 %s26, 1
          %s151 = smul.addr %s150, 16
          %s152 = scalar_lea.vmem [#allocation2], %s151
          %s154 = ssub.s32 256, 256
          %155 = vsyncadd %s149, %s154
          %s156 = smul.addr %s16, 2
          %s157 = smul.addr %s156, 128
          %s158 = scalar_lea.hbm %s0, %s157
          %s160 = sshll.u32 %s152, 4
          %s161 = int_to_ptr.vmem [resolvable:$true] %s160
          %163 = dma.hbm_to_vmem [thread:$0]  %s158, 256, %s161, %s149
        $region28: #{tpu_custom_call.1} parent=23 // pred_fallthru
          _
      $region24: #{tpu_custom_call.1} parent=5 // pred_fallthru
        _
      %p164 = scmp.le.s32.totalorder 1, %s16
      %p165 = scmp.lt.s32.totalorder %s16, 3
      %p166 = pnand %p164, %p165
      %p167 = pneg %p166
      // Predicated region
      $region29: #{tpu_custom_call.1} parent=5 // pred_check
        _
      $region30: #{tpu_custom_call.1} parent=5 // pred_check_branch
        %169 = sbr.rel (%p166) target = $region32
      $region31: #{tpu_custom_call.1} parent=5 // pred_region
        %s170 = ssub.s32 %s16, 1
        %s171 = sand.u32 %s29, 1
        %s172 = scalar_lea.sflag [#allocation3], %s171
        %s173 = sand.u32 %s29, 1
        %s174 = smul.addr %s173, 16
        %s175 = scalar_lea.vmem [#allocation2], %s174
        // Predicated region
        $region33: #{tpu_custom_call.1} parent=31 // pred_check
          %p176 = pneg %p42
        $region34: #{tpu_custom_call.1} parent=31 // pred_check_branch
          %178 = sbr.rel (%p176) target = $region36
        $region35: #{tpu_custom_call.1} parent=31 // pred_region
          %179 = dma.done %s172, 256
        $region36: #{tpu_custom_call.1} parent=31 // pred_fallthru
          _
        // Predicated region
        $region37: #{tpu_custom_call.1} parent=31 // pred_check
          %p180 = pneg %p63
        $region38: #{tpu_custom_call.1} parent=31 // pred_check_branch
          %182 = sbr.rel (%p180) target = $region40
        $region39: #{tpu_custom_call.1} parent=31 // pred_region
          %183 = dma.done [#allocation6], 1024
        $region40: #{tpu_custom_call.1} parent=31 // pred_fallthru
          _
        %s184 = sand.u32 %s29, 1
        %s185 = scalar_lea.sflag [#allocation3], %s184
        %s186 = sand.u32 %s29, 1
        %s187 = smul.addr %s186, 16
        %s188 = scalar_lea.vmem [#allocation2], %s187
        %p189 = pneg %p42
        %p190 = pneg %p39
        %p191 = pneg %p63
        %p192 = pneg %p60
        %p193 = pneg %p84
        %p194 = pneg %p81
        %p195 = pneg %p110
        %p196 = pneg %p107
        %s197 = sand.u32 %s97, 1
        %s198 = scalar_lea.sflag [#allocation4], %s197
        %s199 = sand.u32 %s97, 1
        %s200 = smul.addr %s199, 16
        %s201 = scalar_lea.vmem [#allocation7], %s200
        %v202 = vlaneseq
        %v203 = vshrl.u32 %v202, 7
        %v204 = vadd.s32 %v203, 4294967295
        %vm205 = vcmp.ge.s32.totalorder %v204, 0
        %vm206 = vcmp.lt.s32.totalorder %v204, 8
        %vm207 = vmand %vm205, %vm206
        %v208 = vsel %vm207, 1, 0
        %v209 = vcvt.s32.f32 %v208
        %v210 = vadd.s32 %v203, 1
        %vm211 = vcmp.ge.s32.totalorder %v210, 0
        %vm212 = vcmp.lt.s32.totalorder %v210, 8
        %vm213 = vmand %vm211, %vm212
        %v214 = vsel %vm213, 1, 0
        %v215 = vcvt.s32.f32 %v214
        %v216 = vld [vmem:[%s2] sm:$0x3]
        %v217 = vld [vmem:[%s175] sm:$0xff]
        %v218 = vld [vmem:[%s175 + $0x8] sm:$0xff]
        %v219 = vrot.slane %v217, 7
        %v220 = vrot.slane %v218, 7
        %v221 = vmul.f32 %v219, %v209
        %v222 = vmul.f32 %v220, %v209
        %223 = vrot.lane.b32.xlu0 %v221, 17
        %v224 = vpop.permute.xlu0 %223
        %225 = vrot.lane.b32.xlu0 %v222, 17
        %v226 = vpop.permute.xlu0 %225
        %v227 = vlaneseq
        %v228 = vand.u32 %v227, 127
        %vm229 = vcmp.lt.s32.totalorder %v228, 17
        %v230 = vsel %vm229, %v224, %v226
        %v231 = vsel %vm229, %v226, %v224
        %v232 = vld [vmem:[#allocation5] ss:$8 sm:$0x3]
        %v234 = vlaneseq
        %v235 = vshrl.u32 %v234, 7
        %v236 = vsub.s32 0, %v235
        %v237 = vrot.slane %v232, %v236
        %v238 = vlaneseq
        %v239 = vshrl.u32 %v238, 7
        %v240 = vsub.s32 1, %v239
        %v241 = vrot.slane %v232, %v240
        %v244 = vmul.f32 %v231, %v237
        %v245 = vmul.f32 %v230, %v241
        %v246 = vadd.f32 %v244, 0.0
        %v247 = vadd.f32 %v245, 0.0
        %248 = vrot.lane.b32.xlu0 %v221, 16
        %v249 = vpop.permute.xlu0 %248
        %250 = vrot.lane.b32.xlu0 %v222, 16
        %v251 = vpop.permute.xlu0 %250
        %vm252 = vcmp.lt.s32.totalorder %v228, 16
        %v253 = vsel %vm252, %v249, %v251
        %v254 = vsel %vm252, %v251, %v249
        %s255 = scalar_lea.vmem [#allocation5], 1
        %v256 = vld [vmem:[%s255] ss:$8 sm:$0x3]
        %v258 = vlaneseq
        %v259 = vshrl.u32 %v258, 7
        %v260 = vsub.s32 0, %v259
        %v261 = vrot.slane %v256, %v260
        %v262 = vlaneseq
        %v263 = vshrl.u32 %v262, 7
        %v264 = vsub.s32 1, %v263
        %v265 = vrot.slane %v256, %v264
        %v268 = vmul.f32 %v254, %v261
        %v269 = vmul.f32 %v253, %v265
        %v270 = vadd.f32 %v246, %v268
        %v271 = vadd.f32 %v247, %v269
        %272 = vrot.lane.b32.xlu0 %v221, 15
        %v273 = vpop.permute.xlu0 %272
        %274 = vrot.lane.b32.xlu0 %v222, 15
        %v275 = vpop.permute.xlu0 %274
        %vm276 = vcmp.lt.s32.totalorder %v228, 15
        %v277 = vsel %vm276, %v273, %v275
        %v278 = vsel %vm276, %v275, %v273
        %s279 = scalar_lea.vmem [#allocation5], 2
        %v280 = vld [vmem:[%s279] ss:$8 sm:$0x3]
        %v282 = vlaneseq
        %v283 = vshrl.u32 %v282, 7
        %v284 = vsub.s32 0, %v283
        %v285 = vrot.slane %v280, %v284
        %v286 = vlaneseq
        %v287 = vshrl.u32 %v286, 7
        %v288 = vsub.s32 1, %v287
        %v289 = vrot.slane %v280, %v288
        %v292 = vmul.f32 %v278, %v285
        %v293 = vmul.f32 %v277, %v289
        %v294 = vadd.f32 %v270, %v292
        %v295 = vadd.f32 %v271, %v293
        %296 = vrot.lane.b32.xlu0 %v221, 1
        %v297 = vpop.permute.xlu0 %296
        %298 = vrot.lane.b32.xlu0 %v222, 1
        %v299 = vpop.permute.xlu0 %298
        %vm300 = vcmp.lt.s32.totalorder %v228, 1
        %v301 = vsel %vm300, %v297, %v299
        %v302 = vsel %vm300, %v299, %v297
        %s303 = scalar_lea.vmem [#allocation5], 3
        %v304 = vld [vmem:[%s303] ss:$8 sm:$0x3]
        %v306 = vlaneseq
        %v307 = vshrl.u32 %v306, 7
        %v308 = vsub.s32 0, %v307
        %v309 = vrot.slane %v304, %v308
        %v310 = vlaneseq
        %v311 = vshrl.u32 %v310, 7
        %v312 = vsub.s32 1, %v311
        %v313 = vrot.slane %v304, %v312
        %v316 = vmul.f32 %v302, %v309
        %v317 = vmul.f32 %v301, %v313
        %v318 = vadd.f32 %v294, %v316
        %v319 = vadd.f32 %v295, %v317
        %s320 = scalar_lea.vmem [#allocation5], 4
        %v321 = vld [vmem:[%s320] ss:$8 sm:$0x3]
        %v323 = vlaneseq
        %v324 = vshrl.u32 %v323, 7
        %v325 = vsub.s32 0, %v324
        %v326 = vrot.slane %v321, %v325
        %v327 = vlaneseq
        %v328 = vshrl.u32 %v327, 7
        %v329 = vsub.s32 1, %v328
        %v330 = vrot.slane %v321, %v329
        %v333 = vmul.f32 %v221, %v326
        %v334 = vmul.f32 %v222, %v330
        %v335 = vadd.f32 %v318, %v333
        %v336 = vadd.f32 %v319, %v334
        %337 = vrot.lane.b32.xlu0 %v221, 127
        %v338 = vpop.permute.xlu0 %337
        %339 = vrot.lane.b32.xlu0 %v222, 127
        %v340 = vpop.permute.xlu0 %339
        %vm341 = vcmp.lt.s32.totalorder %v228, 127
        %v342 = vsel %vm341, %v338, %v340
        %v343 = vsel %vm341, %v340, %v338
        %s344 = scalar_lea.vmem [#allocation5], 5
        %v345 = vld [vmem:[%s344] ss:$8 sm:$0x3]
        %v347 = vlaneseq
        %v348 = vshrl.u32 %v347, 7
        %v349 = vsub.s32 0, %v348
        %v350 = vrot.slane %v345, %v349
        %v351 = vlaneseq
        %v352 = vshrl.u32 %v351, 7
        %v353 = vsub.s32 1, %v352
        %v354 = vrot.slane %v345, %v353
        %v357 = vmul.f32 %v342, %v350
        %v358 = vmul.f32 %v343, %v354
        %v359 = vadd.f32 %v335, %v357
        %v360 = vadd.f32 %v336, %v358
        %361 = vrot.lane.b32.xlu0 %v221, 113
        %v362 = vpop.permute.xlu0 %361
        %363 = vrot.lane.b32.xlu0 %v222, 113
        %v364 = vpop.permute.xlu0 %363
        %vm365 = vcmp.lt.s32.totalorder %v228, 113
        %v366 = vsel %vm365, %v362, %v364
        %v367 = vsel %vm365, %v364, %v362
        %s368 = scalar_lea.vmem [#allocation5], 6
        %v369 = vld [vmem:[%s368] ss:$8 sm:$0x3]
        %v371 = vlaneseq
        %v372 = vshrl.u32 %v371, 7
        %v373 = vsub.s32 0, %v372
        %v374 = vrot.slane %v369, %v373
        %v375 = vlaneseq
        %v376 = vshrl.u32 %v375, 7
        %v377 = vsub.s32 1, %v376
        %v378 = vrot.slane %v369, %v377
        %v381 = vmul.f32 %v366, %v374
        %v382 = vmul.f32 %v367, %v378
        %v383 = vadd.f32 %v359, %v381
        %v384 = vadd.f32 %v360, %v382
        %385 = vrot.lane.b32.xlu0 %v221, 112
        %v386 = vpop.permute.xlu0 %385
        %387 = vrot.lane.b32.xlu0 %v222, 112
        %v388 = vpop.permute.xlu0 %387
        %vm389 = vcmp.lt.s32.totalorder %v228, 112
        %v390 = vsel %vm389, %v386, %v388
        %v391 = vsel %vm389, %v388, %v386
        %s392 = scalar_lea.vmem [#allocation5], 7
        %v393 = vld [vmem:[%s392] ss:$8 sm:$0x3]
        %v395 = vlaneseq
        %v396 = vshrl.u32 %v395, 7
        %v397 = vsub.s32 0, %v396
        %v398 = vrot.slane %v393, %v397
        %v399 = vlaneseq
        %v400 = vshrl.u32 %v399, 7
        %v401 = vsub.s32 1, %v400
        %v402 = vrot.slane %v393, %v401
        %v405 = vmul.f32 %v390, %v398
        %v406 = vmul.f32 %v391, %v402
        %v407 = vadd.f32 %v383, %v405
        %v408 = vadd.f32 %v384, %v406
        %409 = vrot.lane.b32.xlu0 %v221, 111
        %v410 = vpop.permute.xlu0 %409
        %411 = vrot.lane.b32.xlu0 %v222, 111
        %v412 = vpop.permute.xlu0 %411
        %vm413 = vcmp.lt.s32.totalorder %v228, 111
        %v414 = vsel %vm413, %v410, %v412
        %v415 = vsel %vm413, %v412, %v410
        %s416 = scalar_lea.vmem [#allocation5], 16
        %v417 = vld [vmem:[%s416] ss:$8 sm:$0x3]
        %v419 = vlaneseq
        %v420 = vshrl.u32 %v419, 7
        %v421 = vsub.s32 0, %v420
        %v422 = vrot.slane %v417, %v421
        %v423 = vlaneseq
        %v424 = vshrl.u32 %v423, 7
        %v425 = vsub.s32 1, %v424
        %v426 = vrot.slane %v417, %v425
        %v429 = vmul.f32 %v414, %v422
        %v430 = vmul.f32 %v415, %v426
        %v431 = vadd.f32 %v407, %v429
        %v432 = vadd.f32 %v408, %v430
        %433 = vrot.lane.b32.xlu0 %v217, 17
        %v434 = vpop.permute.xlu0 %433
        %435 = vrot.lane.b32.xlu0 %v218, 17
        %v436 = vpop.permute.xlu0 %435
        %v437 = vsel %vm229, %v434, %v436
        %v438 = vsel %vm229, %v436, %v434
        %s439 = scalar_lea.vmem [#allocation5], 17
        %v440 = vld [vmem:[%s439] ss:$8 sm:$0x3]
        %v442 = vlaneseq
        %v443 = vshrl.u32 %v442, 7
        %v444 = vsub.s32 0, %v443
        %v445 = vrot.slane %v440, %v444
        %v446 = vlaneseq
        %v447 = vshrl.u32 %v446, 7
        %v448 = vsub.s32 1, %v447
        %v449 = vrot.slane %v440, %v448
        %v452 = vmul.f32 %v438, %v445
        %v453 = vmul.f32 %v437, %v449
        %v454 = vadd.f32 %v431, %v452
        %v455 = vadd.f32 %v432, %v453
        %456 = vrot.lane.b32.xlu0 %v217, 16
        %v457 = vpop.permute.xlu0 %456
        %458 = vrot.lane.b32.xlu0 %v218, 16
        %v459 = vpop.permute.xlu0 %458
        %v460 = vsel %vm252, %v457, %v459
        %v461 = vsel %vm252, %v459, %v457
        %s462 = scalar_lea.vmem [#allocation5], 18
        %v463 = vld [vmem:[%s462] ss:$8 sm:$0x3]
        %v465 = vlaneseq
        %v466 = vshrl.u32 %v465, 7
        %v467 = vsub.s32 0, %v466
        %v468 = vrot.slane %v463, %v467
        %v469 = vlaneseq
        %v470 = vshrl.u32 %v469, 7
        %v471 = vsub.s32 1, %v470
        %v472 = vrot.slane %v463, %v471
        %v475 = vmul.f32 %v461, %v468
        %v476 = vmul.f32 %v460, %v472
        %v477 = vadd.f32 %v454, %v475
        %v478 = vadd.f32 %v455, %v476
        %479 = vrot.lane.b32.xlu0 %v217, 15
        %v480 = vpop.permute.xlu0 %479
        %481 = vrot.lane.b32.xlu0 %v218, 15
        %v482 = vpop.permute.xlu0 %481
        %v483 = vsel %vm276, %v480, %v482
        %v484 = vsel %vm276, %v482, %v480
        %s485 = scalar_lea.vmem [#allocation5], 19
        %v486 = vld [vmem:[%s485] ss:$8 sm:$0x3]
        %v488 = vlaneseq
        %v489 = vshrl.u32 %v488, 7
        %v490 = vsub.s32 0, %v489
        %v491 = vrot.slane %v486, %v490
        %v492 = vlaneseq
        %v493 = vshrl.u32 %v492, 7
        %v494 = vsub.s32 1, %v493
        %v495 = vrot.slane %v486, %v494
        %v498 = vmul.f32 %v484, %v491
        %v499 = vmul.f32 %v483, %v495
        %v500 = vadd.f32 %v477, %v498
        %v501 = vadd.f32 %v478, %v499
        %502 = vrot.lane.b32.xlu0 %v217, 1
        %v503 = vpop.permute.xlu0 %502
        %504 = vrot.lane.b32.xlu0 %v218, 1
        %v505 = vpop.permute.xlu0 %504
        %v506 = vsel %vm300, %v503, %v505
        %v507 = vsel %vm300, %v505, %v503
        %s508 = scalar_lea.vmem [#allocation5], 20
        %v509 = vld [vmem:[%s508] ss:$8 sm:$0x3]
        %v511 = vlaneseq
        %v512 = vshrl.u32 %v511, 7
        %v513 = vsub.s32 0, %v512
        %v514 = vrot.slane %v509, %v513
        %v515 = vlaneseq
        %v516 = vshrl.u32 %v515, 7
        %v517 = vsub.s32 1, %v516
        %v518 = vrot.slane %v509, %v517
        %v521 = vmul.f32 %v507, %v514
        %v522 = vmul.f32 %v506, %v518
        %v523 = vadd.f32 %v500, %v521
        %v524 = vadd.f32 %v501, %v522
        %s525 = scalar_lea.vmem [#allocation5], 21
        %v526 = vld [vmem:[%s525] ss:$8 sm:$0x3]
        %v528 = vlaneseq
        %v529 = vshrl.u32 %v528, 7
        %v530 = vsub.s32 0, %v529
        %v531 = vrot.slane %v526, %v530
        %v532 = vlaneseq
        %v533 = vshrl.u32 %v532, 7
        %v534 = vsub.s32 1, %v533
        %v535 = vrot.slane %v526, %v534
        %v538 = vmul.f32 %v217, %v531
        %v539 = vmul.f32 %v218, %v535
        %v540 = vadd.f32 %v523, %v538
        %v541 = vadd.f32 %v524, %v539
        %542 = vrot.lane.b32.xlu0 %v217, 127
        %v543 = vpop.permute.xlu0 %542
        %544 = vrot.lane.b32.xlu0 %v218, 127
        %v545 = vpop.permute.xlu0 %544
        %v546 = vsel %vm341, %v543, %v545
        %v547 = vsel %vm341, %v545, %v543
        %s548 = scalar_lea.vmem [#allocation5], 22
        %v549 = vld [vmem:[%s548] ss:$8 sm:$0x3]
        %v551 = vlaneseq
        %v552 = vshrl.u32 %v551, 7
        %v553 = vsub.s32 0, %v552
        %v554 = vrot.slane %v549, %v553
        %v555 = vlaneseq
        %v556 = vshrl.u32 %v555, 7
        %v557 = vsub.s32 1, %v556
        %v558 = vrot.slane %v549, %v557
        %v561 = vmul.f32 %v546, %v554
        %v562 = vmul.f32 %v547, %v558
        %v563 = vadd.f32 %v540, %v561
        %v564 = vadd.f32 %v541, %v562
        %565 = vrot.lane.b32.xlu0 %v217, 113
        %v566 = vpop.permute.xlu0 %565
        %567 = vrot.lane.b32.xlu0 %v218, 113
        %v568 = vpop.permute.xlu0 %567
        %v569 = vsel %vm365, %v566, %v568
        %v570 = vsel %vm365, %v568, %v566
        %s571 = scalar_lea.vmem [#allocation5], 23
        %v572 = vld [vmem:[%s571] ss:$8 sm:$0x3]
        %v574 = vlaneseq
        %v575 = vshrl.u32 %v574, 7
        %v576 = vsub.s32 0, %v575
        %v577 = vrot.slane %v572, %v576
        %v578 = vlaneseq
        %v579 = vshrl.u32 %v578, 7
        %v580 = vsub.s32 1, %v579
        %v581 = vrot.slane %v572, %v580
        %v584 = vmul.f32 %v569, %v577
        %v585 = vmul.f32 %v570, %v581
        %v586 = vadd.f32 %v563, %v584
        %v587 = vadd.f32 %v564, %v585
        %588 = vrot.lane.b32.xlu0 %v217, 112
        %v589 = vpop.permute.xlu0 %588
        %590 = vrot.lane.b32.xlu0 %v218, 112
        %v591 = vpop.permute.xlu0 %590
        %v592 = vsel %vm389, %v589, %v591
        %v593 = vsel %vm389, %v591, %v589
        %s594 = scalar_lea.vmem [#allocation5], 32
        %v595 = vld [vmem:[%s594] ss:$8 sm:$0x3]
        %v597 = vlaneseq
        %v598 = vshrl.u32 %v597, 7
        %v599 = vsub.s32 0, %v598
        %v600 = vrot.slane %v595, %v599
        %v601 = vlaneseq
        %v602 = vshrl.u32 %v601, 7
        %v603 = vsub.s32 1, %v602
        %v604 = vrot.slane %v595, %v603
        %v607 = vmul.f32 %v592, %v600
        %v608 = vmul.f32 %v593, %v604
        %v609 = vadd.f32 %v586, %v607
        %v610 = vadd.f32 %v587, %v608
        %611 = vrot.lane.b32.xlu0 %v217, 111
        %v612 = vpop.permute.xlu0 %611
        %613 = vrot.lane.b32.xlu0 %v218, 111
        %v614 = vpop.permute.xlu0 %613
        %v615 = vsel %vm413, %v612, %v614
        %v616 = vsel %vm413, %v614, %v612
        %s617 = scalar_lea.vmem [#allocation5], 33
        %v618 = vld [vmem:[%s617] ss:$8 sm:$0x3]
        %v620 = vlaneseq
        %v621 = vshrl.u32 %v620, 7
        %v622 = vsub.s32 0, %v621
        %v623 = vrot.slane %v618, %v622
        %v624 = vlaneseq
        %v625 = vshrl.u32 %v624, 7
        %v626 = vsub.s32 1, %v625
        %v627 = vrot.slane %v618, %v626
        %v630 = vmul.f32 %v615, %v623
        %v631 = vmul.f32 %v616, %v627
        %v632 = vadd.f32 %v609, %v630
        %v633 = vadd.f32 %v610, %v631
        %v634 = vrot.slane %v217, 1
        %v635 = vrot.slane %v218, 1
        %v636 = vmul.f32 %v634, %v215
        %v637 = vmul.f32 %v635, %v215
        %638 = vrot.lane.b32.xlu0 %v636, 17
        %v639 = vpop.permute.xlu0 %638
        %640 = vrot.lane.b32.xlu0 %v637, 17
        %v641 = vpop.permute.xlu0 %640
        %v642 = vsel %vm229, %v639, %v641
        %v643 = vsel %vm229, %v641, %v639
        %s644 = scalar_lea.vmem [#allocation5], 34
        %v645 = vld [vmem:[%s644] ss:$8 sm:$0x3]
        %v647 = vlaneseq
        %v648 = vshrl.u32 %v647, 7
        %v649 = vsub.s32 0, %v648
        %v650 = vrot.slane %v645, %v649
        %v651 = vlaneseq
        %v652 = vshrl.u32 %v651, 7
        %v653 = vsub.s32 1, %v652
        %v654 = vrot.slane %v645, %v653
        %v657 = vmul.f32 %v643, %v650
        %v658 = vmul.f32 %v642, %v654
        %v659 = vadd.f32 %v632, %v657
        %v660 = vadd.f32 %v633, %v658
        %661 = vrot.lane.b32.xlu0 %v636, 16
        %v662 = vpop.permute.xlu0 %661
        %663 = vrot.lane.b32.xlu0 %v637, 16
        %v664 = vpop.permute.xlu0 %663
        %v665 = vsel %vm252, %v662, %v664
        %v666 = vsel %vm252, %v664, %v662
        %s667 = scalar_lea.vmem [#allocation5], 35
        %v668 = vld [vmem:[%s667] ss:$8 sm:$0x3]
        %v670 = vlaneseq
        %v671 = vshrl.u32 %v670, 7
        %v672 = vsub.s32 0, %v671
        %v673 = vrot.slane %v668, %v672
        %v674 = vlaneseq
        %v675 = vshrl.u32 %v674, 7
        %v676 = vsub.s32 1, %v675
        %v677 = vrot.slane %v668, %v676
        %v680 = vmul.f32 %v666, %v673
        %v681 = vmul.f32 %v665, %v677
        %v682 = vadd.f32 %v659, %v680
        %v683 = vadd.f32 %v660, %v681
        %684 = vrot.lane.b32.xlu0 %v636, 15
        %v685 = vpop.permute.xlu0 %684
        %686 = vrot.lane.b32.xlu0 %v637, 15
        %v687 = vpop.permute.xlu0 %686
        %v688 = vsel %vm276, %v685, %v687
        %v689 = vsel %vm276, %v687, %v685
        %s690 = scalar_lea.vmem [#allocation5], 36
        %v691 = vld [vmem:[%s690] ss:$8 sm:$0x3]
        %v693 = vlaneseq
        %v694 = vshrl.u32 %v693, 7
        %v695 = vsub.s32 0, %v694
        %v696 = vrot.slane %v691, %v695
        %v697 = vlaneseq
        %v698 = vshrl.u32 %v697, 7
        %v699 = vsub.s32 1, %v698
        %v700 = vrot.slane %v691, %v699
        %v703 = vmul.f32 %v689, %v696
        %v704 = vmul.f32 %v688, %v700
        %v705 = vadd.f32 %v682, %v703
        %v706 = vadd.f32 %v683, %v704
        %707 = vrot.lane.b32.xlu0 %v636, 1
        %v708 = vpop.permute.xlu0 %707
        %709 = vrot.lane.b32.xlu0 %v637, 1
        %v710 = vpop.permute.xlu0 %709
        %v711 = vsel %vm300, %v708, %v710
        %v712 = vsel %vm300, %v710, %v708
        %s713 = scalar_lea.vmem [#allocation5], 37
        %v714 = vld [vmem:[%s713] ss:$8 sm:$0x3]
        %v716 = vlaneseq
        %v717 = vshrl.u32 %v716, 7
        %v718 = vsub.s32 0, %v717
        %v719 = vrot.slane %v714, %v718
        %v720 = vlaneseq
        %v721 = vshrl.u32 %v720, 7
        %v722 = vsub.s32 1, %v721
        %v723 = vrot.slane %v714, %v722
        %v726 = vmul.f32 %v712, %v719
        %v727 = vmul.f32 %v711, %v723
        %v728 = vadd.f32 %v705, %v726
        %v729 = vadd.f32 %v706, %v727
        %s730 = scalar_lea.vmem [#allocation5], 38
        %v731 = vld [vmem:[%s730] ss:$8 sm:$0x3]
        %v733 = vlaneseq
        %v734 = vshrl.u32 %v733, 7
        %v735 = vsub.s32 0, %v734
        %v736 = vrot.slane %v731, %v735
        %v737 = vlaneseq
        %v738 = vshrl.u32 %v737, 7
        %v739 = vsub.s32 1, %v738
        %v740 = vrot.slane %v731, %v739
        %v743 = vmul.f32 %v636, %v736
        %v744 = vmul.f32 %v637, %v740
        %v745 = vadd.f32 %v728, %v743
        %v746 = vadd.f32 %v729, %v744
        %747 = vrot.lane.b32.xlu0 %v636, 127
        %v748 = vpop.permute.xlu0 %747
        %749 = vrot.lane.b32.xlu0 %v637, 127
        %v750 = vpop.permute.xlu0 %749
        %v751 = vsel %vm341, %v748, %v750
        %v752 = vsel %vm341, %v750, %v748
        %s753 = scalar_lea.vmem [#allocation5], 39
        %v754 = vld [vmem:[%s753] ss:$8 sm:$0x3]
        %v756 = vlaneseq
        %v757 = vshrl.u32 %v756, 7
        %v758 = vsub.s32 0, %v757
        %v759 = vrot.slane %v754, %v758
        %v760 = vlaneseq
        %v761 = vshrl.u32 %v760, 7
        %v762 = vsub.s32 1, %v761
        %v763 = vrot.slane %v754, %v762
        %v766 = vmul.f32 %v751, %v759
        %v767 = vmul.f32 %v752, %v763
        %v768 = vadd.f32 %v745, %v766
        %v769 = vadd.f32 %v746, %v767
        %770 = vrot.lane.b32.xlu0 %v636, 113
        %v771 = vpop.permute.xlu0 %770
        %772 = vrot.lane.b32.xlu0 %v637, 113
        %v773 = vpop.permute.xlu0 %772
        %v774 = vsel %vm365, %v771, %v773
        %v775 = vsel %vm365, %v773, %v771
        %s776 = scalar_lea.vmem [#allocation5], 48
        %v777 = vld [vmem:[%s776] ss:$8 sm:$0x3]
        %v779 = vlaneseq
        %v780 = vshrl.u32 %v779, 7
        %v781 = vsub.s32 0, %v780
        %v782 = vrot.slane %v777, %v781
        %v783 = vlaneseq
        %v784 = vshrl.u32 %v783, 7
        %v785 = vsub.s32 1, %v784
        %v786 = vrot.slane %v777, %v785
        %v789 = vmul.f32 %v774, %v782
        %v790 = vmul.f32 %v775, %v786
        %v791 = vadd.f32 %v768, %v789
        %v792 = vadd.f32 %v769, %v790
        %793 = vrot.lane.b32.xlu0 %v636, 112
        %v794 = vpop.permute.xlu0 %793
        %795 = vrot.lane.b32.xlu0 %v637, 112
        %v796 = vpop.permute.xlu0 %795
        %v797 = vsel %vm389, %v794, %v796
        %v798 = vsel %vm389, %v796, %v794
        %s799 = scalar_lea.vmem [#allocation5], 49
        %v800 = vld [vmem:[%s799] ss:$8 sm:$0x3]
        %v802 = vlaneseq
        %v803 = vshrl.u32 %v802, 7
        %v804 = vsub.s32 0, %v803
        %v805 = vrot.slane %v800, %v804
        %v806 = vlaneseq
        %v807 = vshrl.u32 %v806, 7
        %v808 = vsub.s32 1, %v807
        %v809 = vrot.slane %v800, %v808
        %v812 = vmul.f32 %v797, %v805
        %v813 = vmul.f32 %v798, %v809
        %v814 = vadd.f32 %v791, %v812
        %v815 = vadd.f32 %v792, %v813
        %816 = vrot.lane.b32.xlu0 %v636, 111
        %v817 = vpop.permute.xlu0 %816
        %818 = vrot.lane.b32.xlu0 %v637, 111
        %v819 = vpop.permute.xlu0 %818
        %v820 = vsel %vm413, %v817, %v819
        %v821 = vsel %vm413, %v819, %v817
        %s822 = scalar_lea.vmem [#allocation5], 50
        %v823 = vld [vmem:[%s822] ss:$8 sm:$0x3]
        %v825 = vlaneseq
        %v826 = vshrl.u32 %v825, 7
        %v827 = vsub.s32 0, %v826
        %v828 = vrot.slane %v823, %v827
        %v829 = vlaneseq
        %v830 = vshrl.u32 %v829, 7
        %v831 = vsub.s32 1, %v830
        %v832 = vrot.slane %v823, %v831
        %v835 = vmul.f32 %v820, %v828
        %v836 = vmul.f32 %v821, %v832
        %v837 = vadd.f32 %v814, %v835
        %v838 = vadd.f32 %v815, %v836
        %v840 = vlaneseq
        %v841 = vshrl.u32 %v840, 7
        %v842 = vsub.s32 0, %v841
        %v843 = vrot.slane %v216, %v842
        %v844 = vlaneseq
        %v845 = vshrl.u32 %v844, 7
        %v846 = vsub.s32 1, %v845
        %v847 = vrot.slane %v216, %v846
        %v850 = vadd.f32 %v837, %v843
        %v851 = vadd.f32 %v838, %v847
        %852 = vst [vmem:[%s201] sm:$0xff] %v850
        %853 = vst [vmem:[%s201 + $0x8] sm:$0xff] %v851
        %s854 = sand.u32 %s97, 1
        %s855 = scalar_lea.sflag [#allocation4], %s854
        %s856 = sand.u32 %s97, 1
        %s857 = smul.addr %s856, 16
        %s858 = scalar_lea.vmem [#allocation7], %s857
        // Predicated region
        $region41: #{tpu_custom_call.1} parent=31 // pred_check
          %p859 = pneg %p107
        $region42: #{tpu_custom_call.1} parent=31 // pred_check_branch
          %861 = sbr.rel (%p859) target = $region44
        $region43: #{tpu_custom_call.1} parent=31 // pred_region
          %s863 = ssub.s32 256, 256
          %864 = vsyncadd %s855, %s863
          %s865 = smul.addr %s21, 2
          %s866 = smul.addr %s865, 128
          %s867 = scalar_lea.hbm %s3, %s866
          %s869 = sshll.u32 %s858, 4
          %s870 = int_to_ptr.vmem [resolvable:$true] %s869
          %872 = dma.vmem_to_hbm [thread:$0]  %s870, 256, %s867, %s855
        $region44: #{tpu_custom_call.1} parent=31 // pred_fallthru
          _
      $region32: #{tpu_custom_call.1} parent=5 // pred_fallthru
        _
      %p873 = scmp.le.s32.totalorder 2, %s16
      // Predicated region
      $region45: #{tpu_custom_call.1} parent=5 // pred_check
        %p874 = pneg %p873
      $region46: #{tpu_custom_call.1} parent=5 // pred_check_branch
        %876 = sbr.rel (%p874) target = $region48
      $region47: #{tpu_custom_call.1} parent=5 // pred_region
        %s877 = ssub.s32 %s16, 2
        // Predicated region
        $region49: #{tpu_custom_call.1} parent=47 // pred_check
          %p878 = pneg %p113
        $region50: #{tpu_custom_call.1} parent=47 // pred_check_branch
          %880 = sbr.rel (%p878) target = $region52
        $region51: #{tpu_custom_call.1} parent=47 // pred_region
          %s881 = sand.u32 %s98, 1
          %s882 = scalar_lea.sflag [#allocation4], %s881
          %s883 = sand.u32 %s98, 1
          %s884 = smul.addr %s883, 16
          %s885 = scalar_lea.vmem [#allocation7], %s884
          %886 = dma.done %s882, 256
        $region52: #{tpu_custom_call.1} parent=47 // pred_fallthru
          _
      $region48: #{tpu_custom_call.1} parent=5 // pred_fallthru
        _
    $region6: #{tpu_custom_call.1} parent=1 // loop_footer
      %s20 = sadd.s32 1, %s16
    $region7: #{tpu_custom_call.1} parent=1 // loop_footer_branch
      %15 = sbr.rel target = $region3
    $region8: #{tpu_custom_call.1} parent=1 // loop_exit
      _
    %887 = vsyncpa [#allocation3], 1
    %s888 = scalar_lea.sflag [#allocation3], 1
    %889 = vsyncpa %s888, 1
    %890 = vsyncpa [#allocation6], 1
    %891 = vsyncpa [#allocation4], 1
    %s892 = scalar_lea.sflag [#allocation4], 1
    %893 = vsyncpa %s892, 1

</llo_original>
